<compile_context>
chip_gen: v5e
topology: v5e:2x2
jax: 0.10.0
libtpu: 0.0.40
codegen_flags: <defaults>
</compile_context>

<pallas_src>
import functools

import jax
import jax.numpy as jnp
from jax.experimental import pallas as pl
from jax.experimental.pallas import tpu as pltpu

ALPHA = 1.0
GAMMA = 2               # integer power -> plain multiplies, never pow / extra EUP
LANE = 128              # lane width of the flattened slab
SUBLANE = 8
CHUNK_ROWS = 256        # strip-mine size inside a block (128 KiB f32 per operand)
MAX_TILE_ROWS = 4096    # 2 MiB f32 per input per block; 8 MiB double-buffered total
TARGET_BLOCKS = 4       # aim for >= 4 grid steps (pipelining + v7x 2-core split)
PAD_LOGIT = -100.0      # sentinel whose focal contribution is exactly 0 (NOT -inf)
VMEM_LIMIT_BYTES = 32 * 1024 * 1024


def _round_up(a, b):
    return -(-a // b) * b


def _focal_rows(x, y):
    """focal = (1 - exp(-bce))**2 * bce, with numerically stable BCE-with-logits."""
    x = x.astype(jnp.float32)
    y = y.astype(jnp.float32)
    # bce = max(x, 0) - x*y + log1p(exp(-|x|))   (matches torch.nn.BCEWithLogitsLoss)
    bce = jnp.maximum(x, 0.0) - x * y + jnp.log1p(jnp.exp(-jnp.abs(x)))
    # TODO(synk): for known hard 0/1 targets a select trick + pl.reciprocal(approx=True)
    # would drop one exp/element (helps EUP-bound v7x); kept exact for soft targets.
    pt = jnp.exp(-bce)
    one_minus_pt = 1.0 - pt
    return (one_minus_pt * one_minus_pt) * bce          # gamma == 2 -> VPU multiplies


def _focal_loss_kernel(x_ref, y_ref, out_ref, *, tm, chunk, n_steps, nb, vr):
    """Grid = (partitions, steps); accumulates a resident (8, 128) partial per part."""
    p = pl.program_id(0)
    i = pl.program_id(1)
    blk = p * n_steps + i           # raw (unclamped) block id; >= nb means duplicate

    @pl.when(i == 0)
    def _():
        out_ref[...] = jnp.zeros_like(out_ref)

    def accumulate(focal_chunk):
        # Fold `chunk` rows into the resident (8, LANE) accumulator: pure VPU adds.
        out_ref[...] += focal_chunk.reshape(chunk // SUBLANE, SUBLANE, LANE).sum(axis=0)

    # ---- fast path: blocks made entirely of valid rows (no masking at all) --------
    n_full_blocks = nb - 1 if vr < tm else nb            # static python int

    @pl.when(blk < n_full_blocks)
    def _():
        def body(c, carry):
            r0 = c * chunk
            if not isinstance(r0, int):
                r0 = pl.multiple_of(r0, chunk)
            accumulate(_focal_rows(x_ref[pl.ds(r0, chunk), :],
                                   y_ref[pl.ds(r0, chunk), :]))
            return carry

        jax.lax.fori_loop(0, tm // chunk, body, 0, unroll=True)

    # ---- cold path: the single row-partial last block (emitted only if it exists) --
    if vr < tm:

        @pl.when(blk == nb - 1)
        def _():
            n_valid_chunks = -(-vr // chunk)
            for c in range(n_valid_chunks):              # executes on one block only
                r0 = c * chunk                           # static offsets
                f = _focal_rows(x_ref[pl.ds(r0, chunk), :],
                                y_ref[pl.ds(r0, chunk), :])
                lim = vr - r0                            # static
                if lim < chunk:
                    row = jax.lax.broadcasted_iota(jnp.int32, (chunk, LANE), 0)
                    f = jnp.where(row < lim, f, 0.0)     # discard OOB-garbage rows
                accumulate(f)


@jax.jit
def focal_loss(inputs, targets):
    assert inputs.shape == targets.shape
    total = inputs.size

    x_flat = inputs.reshape(-1)                          # free bitcast
    y_flat = targets.reshape(-1)

    tail = total % LANE
    if tail:
        # Ragged total: pad only to the next 128 multiple with a sentinel whose focal
        # contribution is exactly 0.  This is the only path that rewrites the inputs.
        pad_e = LANE - tail
        x_flat = jnp.pad(x_flat, (0, pad_e), constant_values=PAD_LOGIT)
        y_flat = jnp.pad(y_flat, (0, pad_e))
    m = x_flat.size // LANE                              # rows of the (m, 128) slab
    x2 = x_flat.reshape(m, LANE)                         # free bitcast
    y2 = y_flat.reshape(m, LANE)

    # ---- tile sizing ---------------------------------------------------------------
    m8 = _round_up(m, SUBLANE)
    if m8 <= CHUNK_ROWS:
        tm = chunk = m8                                  # tiny input: one small block
    else:
        chunk = CHUNK_ROWS
        tm = _round_up(-(-m8 // TARGET_BLOCKS), CHUNK_ROWS)
        tm = max(CHUNK_ROWS, min(tm, MAX_TILE_ROWS))
    nb = pl.cdiv(m, tm)                                  # real blocks
    vr = m - (nb - 1) * tm                               # valid rows in last block

    # 2-way "parallel" leading axis feeds both v7x TensorCores (no-op on v5e/v6e).
    num_parts = 2 if nb >= 2 else 1
    n_steps = pl.cdiv(nb, num_parts)
    last_blk = nb - 1

    kernel = functools.partial(_focal_loss_kernel, tm=tm, chunk=chunk,
                               n_steps=n_steps, nb=nb, vr=vr)

    def in_map(p_, i_):
        # Clamp: if a partition's last step exceeds the real block count it re-reads
        # the final block; the kernel skips its compute (no whole extra padded block).
        return (jnp.minimum(p_ * n_steps + i_, last_blk), 0)

    partials = pl.pallas_call(
        kernel,
        out_shape=jax.ShapeDtypeStruct((num_parts * SUBLANE, LANE), jnp.float32),
        grid_spec=pltpu.PrefetchScalarGridSpec(
            num_scalar_prefetch=0,
            grid=(num_parts, n_steps),
            in_specs=[
                pl.BlockSpec((tm, LANE), in_map),
                pl.BlockSpec((tm, LANE), in_map),
            ],
            out_specs=pl.BlockSpec((SUBLANE, LANE), lambda p_, i_: (p_, 0)),
        ),
        compiler_params=pltpu.CompilerParams(
            dimension_semantics=("parallel", "arbitrary"),
            vmem_limit_bytes=VMEM_LIMIT_BYTES,
        ),
    )(x2, y2)

    # Final tiny cross-lane reduce + mean + alpha, done by XLA.
    return jnp.sum(partials) * (ALPHA / total)


def focal_loss_ref(inputs, targets):
    x = inputs.astype(jnp.float32)
    y = targets.astype(jnp.float32)
    bce = jnp.maximum(x, 0.0) - x * y + jnp.log1p(jnp.exp(-jnp.abs(x)))
    pt = jnp.exp(-bce)
    return jnp.mean(ALPHA * (1.0 - pt) ** GAMMA * bce)


if __name__ == "__main__":
    key = jax.random.PRNGKey(0)

    def check(shape, k, dtype=jnp.float32):
        k1, k2 = jax.random.split(k)
        x = jax.random.normal(k1, shape, dtype=jnp.float32).astype(dtype)   # logits
        t = jax.random.bernoulli(k2, 0.5, shape).astype(dtype)              # targets
        out = jax.block_until_ready(focal_loss(x, t))
        ref = focal_loss_ref(x, t)
        assert jnp.allclose(out, ref, rtol=1e-5, atol=1e-5), (shape, dtype, out, ref)

    k0, k1, k2, k3 = jax.random.split(key, 4)
    # Primary small NCHW case matching the module usage (lane-aligned zero-copy path).
    check((2, 4, 16, 16), k0)
    # Total not divisible by 128 -> sentinel-pad path + row-partial last-block mask.
    check((2, 3, 15, 17), k1)
    # Larger case -> multi-block grid, 2-partition "parallel" axis, chunked fori loop.
    check((8, 4, 128, 128), k2)
    # Reduced-precision input path (upcast in-kernel).
    check((2, 4, 16, 16), k3, jnp.bfloat16)

    print("KERNEL_OK")
</pallas_src>

<mosaic_0001>
module attributes {stable_mosaic.version = 11 : i64} {
  func.func @_focal_loss_kernel(%arg0: i32, %arg1: i32, %arg2: memref<16x128xf32, #tpu.memory_space<vmem>>, %arg3: memref<16x128xf32, #tpu.memory_space<vmem>>, %arg4: memref<8x128xf32, #tpu.memory_space<vmem>>) attributes {dimension_semantics = [#tpu.dimension_semantics<parallel>, #tpu.dimension_semantics<arbitrary>], iteration_bounds = array<i64: 1, 1>, scalar_prefetch = 0 : i64, scratch_operands = 0 : i64, tpu.core_type = #tpu.core_type<tc>, window_params = [{transform_indices = @transform_0, window_bounds = array<i64: 16, 128>}, {transform_indices = @transform_1, window_bounds = array<i64: 16, 128>}, {transform_indices = @transform_2, window_bounds = array<i64: 8, 128>}]} {
    %c1_i32 = arith.constant 1 : i32
    %0 = arith.muli %arg0, %c1_i32 : i32
    %1 = arith.addi %0, %arg1 : i32
    %c0_i32 = arith.constant 0 : i32
    %2 = arith.cmpi eq, %arg1, %c0_i32 : i32
    %3 = arith.extui %2 : i1 to i32
    %c0_i32_0 = arith.constant 0 : i32
    %4 = arith.cmpi ne, %3, %c0_i32_0 : i32
    scf.if %4 {
      %cst = arith.constant 0.000000e+00 : f32
      %8 = vector.broadcast %cst : f32 to vector<8x128xf32>
      %c0 = arith.constant 0 : index
      %c0_3 = arith.constant 0 : index
      %9 = vector.load %arg4[%c0, %c0_3] : memref<8x128xf32, #tpu.memory_space<vmem>>, vector<8x128xf32>
      tpu.vector_store %arg4[%c0, %c0_3], %8 {strides = array<i32>} : memref<8x128xf32, #tpu.memory_space<vmem>>, vector<8x128xf32>,
    } else {
    }
    %c1_i32_1 = arith.constant 1 : i32
    %5 = arith.cmpi slt, %1, %c1_i32_1 : i32
    %6 = arith.extui %5 : i1 to i32
    %c0_i32_2 = arith.constant 0 : i32
    %7 = arith.cmpi ne, %6, %c0_i32_2 : i32
    scf.if %7 {
      %c0_i32_3 = arith.constant 0 : i32
      %c16_i32 = arith.constant 16 : i32
      %8 = arith.muli %c0_i32_3, %c16_i32 : i32
      %9 = tpu.assume_multiple %8, 16 : i32
      %10 = arith.index_cast %9 : i32 to index
      %c0 = arith.constant 0 : index
      %11 = vector.load %arg2[%10, %c0] : memref<16x128xf32, #tpu.memory_space<vmem>>, vector<16x128xf32>
      %12 = arith.index_cast %9 : i32 to index
      %c0_4 = arith.constant 0 : index
      %13 = vector.load %arg3[%12, %c0_4] : memref<16x128xf32, #tpu.memory_space<vmem>>, vector<16x128xf32>
      %cst = arith.constant 0.000000e+00 : f32
      %14 = vector.broadcast %cst : f32 to vector<16x128xf32>
      %15 = arith.maximumf %11, %14 : vector<16x128xf32>
      %16 = arith.mulf %11, %13 : vector<16x128xf32>
      %17 = arith.subf %15, %16 : vector<16x128xf32>
      %18 = math.absf %11 : vector<16x128xf32>
      %cst_5 = arith.constant 0.000000e+00 : f32
      %19 = vector.broadcast %cst_5 : f32 to vector<16x128xf32>
      %20 = arith.subf %19, %18 : vector<16x128xf32>
      %21 = math.exp %20 : vector<16x128xf32>
      %22 = math.log1p %21 : vector<16x128xf32>
      %23 = arith.addf %17, %22 : vector<16x128xf32>
      %cst_6 = arith.constant 0.000000e+00 : f32
      %24 = vector.broadcast %cst_6 : f32 to vector<16x128xf32>
      %25 = arith.subf %24, %23 : vector<16x128xf32>
      %26 = math.exp %25 : vector<16x128xf32>
      %cst_7 = arith.constant 1.000000e+00 : f32
      %27 = vector.broadcast %cst_7 : f32 to vector<16x128xf32>
      %28 = arith.subf %27, %26 : vector<16x128xf32>
      %29 = arith.mulf %28, %28 : vector<16x128xf32>
      %30 = arith.mulf %29, %23 : vector<16x128xf32>
      %c0_8 = arith.constant 0 : index
      %c0_9 = arith.constant 0 : index
      %31 = vector.load %arg4[%c0_8, %c0_9] : memref<8x128xf32, #tpu.memory_space<vmem>>, vector<8x128xf32>
      %32 = vector.shape_cast %30 : vector<16x128xf32> to vector<2x8x128xf32>
      %cst_10 = arith.constant dense<0.000000e+00> : vector<8x128xf32>
      %33 = vector.multi_reduction <add>, %32, %cst_10 [0] : vector<2x8x128xf32> to vector<8x128xf32>
      %34 = arith.addf %31, %33 : vector<8x128xf32>
      %c0_11 = arith.constant 0 : index
      %c0_12 = arith.constant 0 : index
      %35 = vector.load %arg4[%c0_11, %c0_12] : memref<8x128xf32, #tpu.memory_space<vmem>>, vector<8x128xf32>
      tpu.vector_store %arg4[%c0_11, %c0_12], %34 {strides = array<i32>} : memref<8x128xf32, #tpu.memory_space<vmem>>, vector<8x128xf32>,
      %c1_i32_13 = arith.constant 1 : i32
    } else {
    }
    return
  }
  func.func @transform_0(%arg0: i32, %arg1: i32) -> (i32, i32) {
    %c1_i32 = arith.constant 1 : i32
    %0 = arith.muli %arg0, %c1_i32 : i32
    %1 = arith.addi %0, %arg1 : i32
    %c0_i32 = arith.constant 0 : i32
    %2 = arith.minsi %1, %c0_i32 : i32
    %c0_i32_0 = arith.constant 0 : i32
    %c0_i32_1 = arith.constant 0 : i32
    return %2, %c0_i32_0 : i32, i32
  }
  func.func @transform_1(%arg0: i32, %arg1: i32) -> (i32, i32) {
    %c1_i32 = arith.constant 1 : i32
    %0 = arith.muli %arg0, %c1_i32 : i32
    %1 = arith.addi %0, %arg1 : i32
    %c0_i32 = arith.constant 0 : i32
    %2 = arith.minsi %1, %c0_i32 : i32
    %c0_i32_0 = arith.constant 0 : i32
    %c0_i32_1 = arith.constant 0 : i32
    return %2, %c0_i32_0 : i32, i32
  }
  func.func @transform_2(%arg0: i32, %arg1: i32) -> (i32, i32) {
    %c0_i32 = arith.constant 0 : i32
    %c0_i32_0 = arith.constant 0 : i32
    return %arg0, %c0_i32 : i32, i32
  }
}

</mosaic_0001>

<llo_original>
// kernel: focal_loss.1
$region0: #{focal_loss.1}
  #allocation0 [shape = 'u32[]', space=smem, size = 0x4, offset = 0x4, fixed_abs, tag = 'smem constant byte address 0x4 - core index']
  #allocation1 [shape = 'u32[72,128]{1,0:T(1,128)}', space=vmem, size = 0x9000, scoped, tag = 'internal scratch']
  %s0 = inlined_call_operand.vmem [shape: f32[16,128], index: 0, kind: input, shape index: {}]
  %s1 = inlined_call_operand.vmem [shape: f32[16,128], index: 1, kind: input, shape index: {}]
  %s2 = inlined_call_operand.vmem [shape: f32[8,128], index: 2, kind: output, shape index: {}]
  %s3 = sld [smem:[#allocation0]]
  $region26: #{focal_loss.1} parent=0
    _
  %s5 = ssub.s32 1, %s3
  %s6 = scalar_select 0, %s5, %s3
  // Predicated region
  $region2: #{focal_loss.1} parent=0 // pred_check
    _
  $region3: #{focal_loss.1} parent=0 // pred_check_branch
    %8 = sbr.rel (0) target = $region5
  $region4: #{focal_loss.1} parent=0 // pred_region
    %s9 = sadd.s32 0, 0
    %p10 = scmp.lt.s32.totalorder %s9, 0
    %s11 = scalar_select %p10, %s9, 0
    %s12 = smul.u32 2, %s11
    %p13 = scmp.lt.s32.totalorder %s12, 1
    %s14 = scalar_select %p13, %s12, 1
    %s15 = smul.addr %s14, 8
    %s16 = scalar_lea.vmem %s0, %s15
    %s17 = sadd.s32 0, 0
    %p18 = scmp.lt.s32.totalorder %s17, 0
    %s19 = scalar_select %p18, %s17, 0
    %s20 = smul.u32 2, %s19
  $region5: #{focal_loss.1} parent=0 // pred_fallthru
    _
  // Predicated region
  $region6: #{focal_loss.1} parent=0 // pred_check
    _
  $region7: #{focal_loss.1} parent=0 // pred_check_branch
    %22 = sbr.rel (0) target = $region9
  $region8: #{focal_loss.1} parent=0 // pred_region
    %s23 = sadd.s32 0, 0
    %p24 = scmp.lt.s32.totalorder %s23, 0
    %s25 = scalar_select %p24, %s23, 0
    %s26 = smul.u32 2, %s25
    %p27 = scmp.lt.s32.totalorder %s26, 1
    %s28 = scalar_select %p27, %s26, 1
    %s29 = smul.addr %s28, 8
    %s30 = scalar_lea.vmem %s1, %s29
    %s31 = sadd.s32 0, 0
    %p32 = scmp.lt.s32.totalorder %s31, 0
    %s33 = scalar_select %p32, %s31, 0
    %s34 = smul.u32 2, %s33
  $region9: #{focal_loss.1} parent=0 // pred_fallthru
    _
  %s35 = sadd.s32 0, 0
  %p36 = scmp.lt.s32.totalorder %s35, 0
  %s37 = scalar_select %p36, %s35, 0
  %s38 = smul.u32 2, %s37
  %p39 = scmp.lt.s32.totalorder %s38, 1
  %s40 = scalar_select %p39, %s38, 1
  %s41 = smul.addr %s40, 8
  %s42 = scalar_lea.vmem %s0, %s41
  %s43 = sadd.s32 0, 0
  %p44 = scmp.lt.s32.totalorder %s43, 0
  %s45 = scalar_select %p44, %s43, 0
  %s46 = smul.u32 2, %s45
  %p47 = scmp.lt.s32.totalorder %s46, 1
  %s48 = scalar_select %p47, %s46, 1
  %s49 = smul.addr %s48, 8
  %s50 = scalar_lea.vmem %s1, %s49
  %s51 = sadd.s32 0, 0
  %p52 = scmp.lt.s32.totalorder %s51, 0
  %s53 = scalar_select %p52, %s51, 0
  %s54 = smul.u32 2, %s53
  %p55 = scmp.lt.s32.totalorder %s54, 1
  %s56 = scalar_select %p55, %s54, 1
  %s57 = smul.addr %s56, 8
  %s58 = scalar_lea.vmem %s0, %s57
  %s59 = sadd.s32 0, 0
  %p60 = scmp.lt.s32.totalorder %s59, 0
  %s61 = scalar_select %p60, %s59, 0
  %s62 = smul.u32 2, %s61
  %s63 = sadd.s32 0, 0
  %p64 = scmp.lt.s32.totalorder %s63, 0
  %s65 = scalar_select %p64, %s63, 0
  %s66 = smul.u32 2, %s65
  %p67 = scmp.lt.s32.totalorder %s66, 1
  %s68 = scalar_select %p67, %s66, 1
  %s69 = smul.addr %s68, 8
  %s70 = scalar_lea.vmem %s1, %s69
  %s71 = sadd.s32 0, 0
  %p72 = scmp.lt.s32.totalorder %s71, 0
  %s73 = scalar_select %p72, %s71, 0
  %s74 = smul.u32 2, %s73
  %s75 = sadd.s32 0, 0
  %p76 = scmp.eq.s32.totalorder 0, 0
  // Predicated region
  $region10: #{focal_loss.1} parent=0 // pred_check
    %p77 = pneg %p76
  $region11: #{focal_loss.1} parent=0 // pred_check_branch
    %79 = sbr.rel (%p77) target = $region13
  $region12: #{focal_loss.1} parent=0 // pred_region
    %80 = vst [vmem:[%s2] sm:$0xff] 0.0
  $region13: #{focal_loss.1} parent=0 // pred_fallthru
    _
  %p81 = scmp.lt.s32.totalorder %s75, 1
  // Predicated region
  $region14: #{focal_loss.1} parent=0 // pred_check
    %p82 = pneg %p81
  $region15: #{focal_loss.1} parent=0 // pred_check_branch
    %84 = sbr.rel (%p82) target = $region17
  $region16: #{focal_loss.1} parent=0 // pred_region
    %v85 = vld [vmem:[%s58] sm:$0xff]
    %v86 = vld [vmem:[%s58 + $0x8] sm:$0xff]
    %v87 = vld [vmem:[%s70] sm:$0xff]
    %v88 = vld [vmem:[%s70 + $0x8] sm:$0xff]
    %v89 = vmax.f32 %v85, 0.0
    %v90 = vmax.f32 %v86, 0.0
    %v91 = vmul.f32 %v85, %v87
    %v92 = vmul.f32 %v86, %v88
    %v93 = vsub.f32 %v89, %v91
    %v94 = vsub.f32 %v90, %v92
    %v95 = vand.u32 2147483647, %v85
    %v96 = vand.u32 2147483647, %v86
    %v97 = vsub.f32 0.0, %v95
    %v98 = vsub.f32 0.0, %v96
    %v99 = vmul.f32 %v97, 1.442695
    %v100 = vpow.pop %v99
    %v101 = vmul.f32 %v98, 1.442695
    %v102 = vpow.pop %v101
    %v103 = vadd.f32 %v100, 1.0
    %v104 = vlog2.pop %v103
    %v105 = vmul.f32 %v104, 0.6931472
    %v106 = vmul.f32 -0.5, %v100
    %v107 = vadd.f32 %v106, 1.0
    %v108 = vmul.f32 %v107, %v100
    %v109 = vand.u32 2147483647, %v100
    %vm110 = vcmp.lt.f32.partialorder %v109, 0.0004427343
    %v111 = vsel %vm110, %v108, %v105
    %v112 = vadd.f32 %v102, 1.0
    %v113 = vlog2.pop %v112
    %v114 = vmul.f32 %v113, 0.6931472
    %v115 = vmul.f32 -0.5, %v102
    %v116 = vadd.f32 %v115, 1.0
    %v117 = vmul.f32 %v116, %v102
    %v118 = vand.u32 2147483647, %v102
    %vm119 = vcmp.lt.f32.partialorder %v118, 0.0004427343
    %v120 = vsel %vm119, %v117, %v114
    %v121 = vadd.f32 %v93, %v111
    %v122 = vadd.f32 %v94, %v120
    %v123 = vsub.f32 0.0, %v121
    %v124 = vsub.f32 0.0, %v122
    %v125 = vmul.f32 %v123, 1.442695
    %v126 = vpow.pop %v125
    %v127 = vmul.f32 %v124, 1.442695
    %v128 = vpow.pop %v127
    %v129 = vsub.f32 1.0, %v126
    %v130 = vsub.f32 1.0, %v128
    %v131 = vmul.f32 %v129, %v129
    %v132 = vmul.f32 %v130, %v130
    %v133 = vmul.f32 %v131, %v121
    %v134 = vmul.f32 %v132, %v122
    %v135 = vld [vmem:[%s2] sm:$0xff]
    %v136 = vadd.f32 %v133, %v134
    %v137 = vadd.f32 %v135, %v136
    %138 = vst [vmem:[%s2] sm:$0xff] %v137
  $region17: #{focal_loss.1} parent=0 // pred_fallthru
    _
  // Predicated region
  $region18: #{focal_loss.1} parent=0 // pred_check
    _
  $region19: #{focal_loss.1} parent=0 // pred_check_branch
    %140 = sbr.rel (0) target = $region21
  $region20: #{focal_loss.1} parent=0 // pred_region
    _
  $region21: #{focal_loss.1} parent=0 // pred_fallthru
    _
  // Predicated region
  $region22: #{focal_loss.1} parent=0 // pred_check
    _
  $region23: #{focal_loss.1} parent=0 // pred_check_branch
    %142 = sbr.rel (0) target = $region25
  $region24: #{focal_loss.1} parent=0 // pred_region
    _
  $region25: #{focal_loss.1} parent=0 // pred_fallthru
    _

</llo_original>
